<compile_context>
chip_gen: v5e
topology: v5e:2x2
jax: 0.10.0
libtpu: 0.0.40
codegen_flags: <defaults>
</compile_context>

<pallas_src>
import math

import jax
import jax.numpy as jnp
from jax.experimental import pallas as pl
from jax.experimental.pallas import tpu as pltpu


def _mlp_kernel(x_ref, w1t_ref, b1_ref, w2t_ref, b2_ref, o_ref):
    # x_ref: (Cin, tile_hw); weights: (hidden, Cin), (Cout, hidden); biases: (C, 1)
    x = x_ref[...]
    h = jnp.dot(w1t_ref[...], x, preferred_element_type=jnp.float32)
    h = jnp.maximum(h + b1_ref[...], 0.0)                      # bias broadcast on lanes
    y = jnp.dot(w2t_ref[...], h, preferred_element_type=jnp.float32)
    o_ref[...] = (y + b2_ref[...]).astype(o_ref.dtype)


def mlp_forward(x_nchw, w1, b1, w2, b2, *, max_tile_hw=2048):
    """Fused 1x1-conv MLP in NCHW-native layout.

    x_nchw: (B, Cin, H, W) -> (B, Cout, H, W)
    w1: (Cin, hidden), b1: (hidden,), w2: (hidden, Cout), b2: (Cout,)
    """
    Bn, Cin, Hn, Wn = x_nchw.shape
    hidden = w1.shape[1]
    Cout = w2.shape[1]
    HW = Hn * Wn

    # Free reshape: channels stay on the second-minor (sublane) axis,
    # H*W lands on the lane axis.
    x = x_nchw.reshape(Bn, Cin, HW)

    # Lane-dense tiling of the H*W axis (multiple of 128, capped for VMEM).
    if HW >= 128:
        tile_hw = min(max_tile_hw, HW)
        tile_hw = max(128, (tile_hw // 128) * 128)
    else:
        tile_hw = HW                       # full-extent block is always legal
    n_hw = pl.cdiv(HW, tile_hw)
    HWp = n_hw * tile_hw
    if HWp != HW:                          # robust to HW not divisible by tile
        x = jnp.pad(x, ((0, 0), (0, 0), (0, HWp - HW)))

    # One-time tiny weight transposes + column biases.
    w1t = jnp.transpose(w1)                # (hidden, Cin)
    w2t = jnp.transpose(w2)                # (Cout, hidden)
    b1c = b1.reshape(hidden, 1)
    b2c = b2.reshape(Cout, 1)

    M = Bn * HW
    cost = pl.CostEstimate(
        flops=2 * M * Cin * hidden + 2 * M * hidden * Cout,
        transcendentals=0,
        bytes_accessed=4 * (Bn * Cin * HWp + Bn * Cout * HWp
                            + Cin * hidden + hidden * Cout + hidden + Cout),
    )

    out = pl.pallas_call(
        _mlp_kernel,
        out_shape=jax.ShapeDtypeStruct((Bn, Cout, HWp), jnp.float32),
        grid=(Bn, n_hw),
        in_specs=[
            pl.BlockSpec((None, Cin, tile_hw), lambda b, t: (b, 0, t)),
            pl.BlockSpec((hidden, Cin), lambda b, t: (0, 0)),
            pl.BlockSpec((hidden, 1), lambda b, t: (0, 0)),
            pl.BlockSpec((Cout, hidden), lambda b, t: (0, 0)),
            pl.BlockSpec((Cout, 1), lambda b, t: (0, 0)),
        ],
        out_specs=pl.BlockSpec((None, Cout, tile_hw), lambda b, t: (b, 0, t)),
        compiler_params=pltpu.CompilerParams(
            dimension_semantics=("parallel", "parallel")),
        cost_estimate=cost,
    )(x, w1t, b1c, w2t, b2c)

    # Drop HW padding (if any) and restore spatial dims -- free reshape only.
    return out[:, :, :HW].reshape(Bn, Cout, Hn, Wn)


# --------------------------------- main --------------------------------------
if __name__ == "__main__":
    # Small shapes consistent with the module (CSDehazeNet-style dims).
    B, Cin, Hn, Wn = 2, 24, 16, 16
    HIDDEN, Cout = 96, 24            # mlp_ratio = 4
    NETWORK_DEPTH = 4

    key = jax.random.PRNGKey(0)
    k1, k2, k3, k4, kx = jax.random.split(key, 5)

    # _init_weights: std = gain * sqrt(2 / (fan_in + fan_out)), bias = 0.
    # TODO(synk): PyTorch uses trunc_normal_; plain normal used here (init only
    # affects parameter values, not forward semantics).  Biases get small random
    # values so the bias-add path is actually exercised by the check.
    gain = (8 * NETWORK_DEPTH) ** (-1 / 4)
    std1 = gain * math.sqrt(2.0 / float(Cin + HIDDEN))
    std2 = gain * math.sqrt(2.0 / float(HIDDEN + Cout))
    w1 = std1 * jax.random.normal(k1, (Cin, HIDDEN), jnp.float32)
    w2 = std2 * jax.random.normal(k2, (HIDDEN, Cout), jnp.float32)
    b1 = 0.01 * jax.random.normal(k3, (HIDDEN,), jnp.float32)
    b2 = 0.01 * jax.random.normal(k4, (Cout,), jnp.float32)

    x = jax.random.normal(kx, (B, Cin, Hn, Wn), jnp.float32)

    out = jax.jit(mlp_forward)(x, w1, b1, w2, b2)
    out = jax.block_until_ready(out)
    assert out.shape == (B, Cout, Hn, Wn)

    # Pure-JAX reference: Conv2d(1x1) -> ReLU -> Conv2d(1x1) on NCHW.
    xr = jnp.transpose(x, (0, 2, 3, 1)).reshape(-1, Cin)
    hr = jnp.maximum(xr @ w1 + b1, 0.0)
    yr = (hr @ w2 + b2).reshape(B, Hn, Wn, Cout).transpose(0, 3, 1, 2)
    max_err = float(jnp.max(jnp.abs(out - yr)))
    assert max_err < 1e-4, f"mismatch vs reference: {max_err}"

    print("KERNEL_OK")
</pallas_src>

<mosaic_0001>
module attributes {stable_mosaic.version = 11 : i64} {
  func.func @_mlp_kernel(%arg0: i32, %arg1: i32, %arg2: memref<1x24x256xf32, #tpu.memory_space<vmem>>, %arg3: memref<96x24xf32, #tpu.memory_space<vmem>>, %arg4: memref<96x1xf32, #tpu.memory_space<vmem>>, %arg5: memref<24x96xf32, #tpu.memory_space<vmem>>, %arg6: memref<24x1xf32, #tpu.memory_space<vmem>>, %arg7: memref<1x24x256xf32, #tpu.memory_space<vmem>>) attributes {dimension_semantics = [#tpu.dimension_semantics<parallel>, #tpu.dimension_semantics<parallel>], iteration_bounds = array<i64: 2, 1>, scalar_prefetch = 0 : i64, scratch_operands = 0 : i64, tpu.core_type = #tpu.core_type<tc>, window_params = [{transform_indices = @transform_0, window_bounds = array<i64: 1, 24, 256>}, {pipeline_mode = #tpu.pipeline_mode<synchronous>, transform_indices = @transform_1, window_bounds = array<i64: 96, 24>}, {pipeline_mode = #tpu.pipeline_mode<synchronous>, transform_indices = @transform_2, window_bounds = array<i64: 96, 1>}, {pipeline_mode = #tpu.pipeline_mode<synchronous>, transform_indices = @transform_3, window_bounds = array<i64: 24, 96>}, {pipeline_mode = #tpu.pipeline_mode<synchronous>, transform_indices = @transform_4, window_bounds = array<i64: 24, 1>}, {transform_indices = @transform_5, window_bounds = array<i64: 1, 24, 256>}]} {
    %c0 = arith.constant 0 : index
    %c0_0 = arith.constant 0 : index
    %c0_1 = arith.constant 0 : index
    %0 = vector.load %arg2[%c0, %c0_0, %c0_1] : memref<1x24x256xf32, #tpu.memory_space<vmem>>, vector<1x24x256xf32>
    %1 = vector.shape_cast %0 : vector<1x24x256xf32> to vector<24x256xf32>
    %c0_2 = arith.constant 0 : index
    %c0_3 = arith.constant 0 : index
    %2 = vector.load %arg3[%c0_2, %c0_3] : memref<96x24xf32, #tpu.memory_space<vmem>>, vector<96x24xf32>
    %cst = arith.constant dense<0.000000e+00> : vector<96x256xf32>
    %3 = tpu.matmul %2, %1, %cst {dimension_numbers = #tpu.dot_dimension_numbers<[1], [0], [0], [1], [0, 0, 1, 1], [], []>} : vector<96x24xf32>, vector<24x256xf32>, vector<96x256xf32> -> vector<96x256xf32>
    %c0_4 = arith.constant 0 : index
    %c0_5 = arith.constant 0 : index
    %4 = vector.load %arg4[%c0_4, %c0_5] : memref<96x1xf32, #tpu.memory_space<vmem>>, vector<96x1xf32>
    %5 = vector.broadcast %4 : vector<96x1xf32> to vector<96x256xf32>
    %6 = arith.addf %3, %5 : vector<96x256xf32>
    %cst_6 = arith.constant 0.000000e+00 : f32
    %7 = vector.broadcast %cst_6 : f32 to vector<96x256xf32>
    %8 = arith.maximumf %6, %7 : vector<96x256xf32>
    %c0_7 = arith.constant 0 : index
    %c0_8 = arith.constant 0 : index
    %9 = vector.load %arg5[%c0_7, %c0_8] : memref<24x96xf32, #tpu.memory_space<vmem>>, vector<24x96xf32>
    %cst_9 = arith.constant dense<0.000000e+00> : vector<24x256xf32>
    %10 = tpu.matmul %9, %8, %cst_9 {dimension_numbers = #tpu.dot_dimension_numbers<[1], [0], [0], [1], [0, 0, 1, 1], [], []>} : vector<24x96xf32>, vector<96x256xf32>, vector<24x256xf32> -> vector<24x256xf32>
    %c0_10 = arith.constant 0 : index
    %c0_11 = arith.constant 0 : index
    %11 = vector.load %arg6[%c0_10, %c0_11] : memref<24x1xf32, #tpu.memory_space<vmem>>, vector<24x1xf32>
    %12 = vector.broadcast %11 : vector<24x1xf32> to vector<24x256xf32>
    %13 = arith.addf %10, %12 : vector<24x256xf32>
    %c0_12 = arith.constant 0 : index
    %c0_13 = arith.constant 0 : index
    %c0_14 = arith.constant 0 : index
    %14 = vector.load %arg7[%c0_12, %c0_13, %c0_14] : memref<1x24x256xf32, #tpu.memory_space<vmem>>, vector<1x24x256xf32>
    %15 = vector.shape_cast %14 : vector<1x24x256xf32> to vector<24x256xf32>
    %16 = vector.shape_cast %13 : vector<24x256xf32> to vector<1x24x256xf32>
    tpu.vector_store %arg7[%c0_12, %c0_13, %c0_14], %16 {strides = array<i32>} : memref<1x24x256xf32, #tpu.memory_space<vmem>>, vector<1x24x256xf32>,
    return
  }
  func.func @transform_0(%arg0: i32, %arg1: i32) -> (i32, i32, i32) {
    %c0_i32 = arith.constant 0 : i32
    %c0_i32_0 = arith.constant 0 : i32
    return %arg0, %c0_i32, %arg1 : i32, i32, i32
  }
  func.func @transform_1(%arg0: i32, %arg1: i32) -> (i32, i32) {
    %c0_i32 = arith.constant 0 : i32
    %c0_i32_0 = arith.constant 0 : i32
    %c0_i32_1 = arith.constant 0 : i32
    return %c0_i32, %c0_i32_0 : i32, i32
  }
  func.func @transform_2(%arg0: i32, %arg1: i32) -> (i32, i32) {
    %c0_i32 = arith.constant 0 : i32
    %c0_i32_0 = arith.constant 0 : i32
    %c0_i32_1 = arith.constant 0 : i32
    return %c0_i32, %c0_i32_0 : i32, i32
  }
  func.func @transform_3(%arg0: i32, %arg1: i32) -> (i32, i32) {
    %c0_i32 = arith.constant 0 : i32
    %c0_i32_0 = arith.constant 0 : i32
    %c0_i32_1 = arith.constant 0 : i32
    return %c0_i32, %c0_i32_0 : i32, i32
  }
  func.func @transform_4(%arg0: i32, %arg1: i32) -> (i32, i32) {
    %c0_i32 = arith.constant 0 : i32
    %c0_i32_0 = arith.constant 0 : i32
    %c0_i32_1 = arith.constant 0 : i32
    return %c0_i32, %c0_i32_0 : i32, i32
  }
  func.func @transform_5(%arg0: i32, %arg1: i32) -> (i32, i32, i32) {
    %c0_i32 = arith.constant 0 : i32
    %c0_i32_0 = arith.constant 0 : i32
    return %arg0, %c0_i32, %arg1 : i32, i32, i32
  }
}

</mosaic_0001>

<llo_original>
// kernel: mlp_forward.1
$region0: #{mlp_forward.1}
  #allocation0 [shape = 'u32[]', space=smem, size = 0x4, offset = 0x4, fixed_abs, tag = 'smem constant byte address 0x4 - core index']
  #allocation1 [shape = 'u32[72,128]{1,0:T(1,128)}', space=vmem, size = 0x9000, scoped, tag = 'internal scratch']
  %s0 = inlined_call_operand.vmem [shape: f32[2,24,256], index: 0, kind: input, shape index: {}]
  %s1 = inlined_call_operand.vmem [shape: f32[96,24], index: 1, kind: input, shape index: {}]
  %s2 = inlined_call_operand.vmem [shape: f32[96,1], index: 2, kind: input, shape index: {}]
  %s3 = inlined_call_operand.vmem [shape: f32[24,96], index: 3, kind: input, shape index: {}]
  %s4 = inlined_call_operand.vmem [shape: f32[24,1], index: 4, kind: input, shape index: {}]
  %s5 = inlined_call_operand.vmem [shape: f32[2,24,256], index: 5, kind: output, shape index: {}]
  %s6 = sld [smem:[#allocation0]]
  $region53: #{mlp_forward.1} parent=0
    _
  %s8 = ssub.s32 1, %s6
  %s9 = scalar_select 0, %s8, %s6
  loop: start=0, step=1, limit=4
  $region2: #{mlp_forward.1} parent=0 // loop_pre_header
    _
  $region3: #{mlp_forward.1} parent=0 // loop_header
    %s11 = sphi 0, %s15
    %p12 = scmp.ge.s32.totalorder %s11, 4
    %s18 = sphi 0, %s30
    %s19 = sphi 0, %s26
    %s20 = sphi 0, %s18
    %s21 = sphi 0, %s19
    %s22 = sphi 0, %s20
    %s23 = sphi 0, %s21
    %s35 = sphi 0, %s37
    %s38 = sphi 0, %s35
    %s39 = sphi 0, %s38
    %s55 = sphi 0, %s39
    %s59 = sphi 0, %s59
    %s61 = sphi 0, %s59
    %s62 = sphi 0, %s61
    %s76 = sphi 0, %s62
    %s80 = sphi 0, %s80
    %s82 = sphi 0, %s80
    %s83 = sphi 0, %s82
    %s97 = sphi 0, %s83
    %s101 = sphi 0, %s101
    %s103 = sphi 0, %s101
    %s104 = sphi 0, %s103
    %s118 = sphi 0, %s104
    %s122 = sphi 0, %s122
    %s124 = sphi 0, %s122
    %s125 = sphi 0, %s124
    %s139 = sphi 0, %s125
    %s147 = sphi 0, %s149
    %s150 = sphi 0, %s147
    %s151 = sphi 0, %s150
    %s167 = sphi 0, %s151
  $region4: #{mlp_forward.1} parent=0 // loop_header_branch
    %14 = sbr.rel (%p12) target = $region8
  $region5: #{mlp_forward.1} parent=0 // loop_body
    %s16 = ssub.s32 %s11, 1
    %s17 = ssub.s32 %s11, 2
    %s24 = sadd.s32 1, %s19
    %p25 = scmp.ge.s32.totalorder %s24, 1
    %s26 = scalar_select %p25, 0, %s24
    %s27 = sadd.s32 1, %s18
    %s28 = scalar_select %p25, %s27, %s18
    %p29 = scmp.ge.s32.totalorder %s28, 2
    %s30 = scalar_select %p29, 0, %s28
    %s31 = ssub.s32 %s18, %s30
    %s32 = ssub.s32 %s19, %s26
    %s33 = sor.u32 %s31, %s32
    %p34 = scmp.eq.s32.totalorder %s33, 0
    %s36 = sadd.s32 %s35, 1
    %s37 = scalar_select %p34, %s35, %s36
    %p40 = pneg %p34
    %p41 = scmp.eq.s32.totalorder %s11, 1
    %p42 = por %p40, %p41
    %p43 = scmp.ne.s32.totalorder %s35, %s38
    %p44 = scmp.eq.s32.totalorder %s11, 0
    %p45 = por %p43, %p44
    %p46 = scmp.ne.s32.totalorder %s35, %s38
    %p47 = scmp.eq.s32.totalorder %s16, 1
    %p48 = por %p46, %p47
    %p49 = scmp.ne.s32.totalorder %s38, %s39
    %p50 = scmp.eq.s32.totalorder %s16, 0
    %p51 = por %p49, %p50
    %p52 = scmp.ne.s32.totalorder %s38, %s39
    %p53 = scmp.eq.s32.totalorder %s17, 1
    %p54 = por %p52, %p53
    %p56 = scmp.ne.s32.totalorder %s39, %s55
    %p57 = scmp.eq.s32.totalorder %s17, 0
    %p58 = por %p56, %p57
    %s60 = sadd.s32 %s59, 1
    %p63 = scmp.eq.s32.totalorder %s11, 1
    %p64 = scmp.ne.s32.totalorder %s59, %s61
    %p65 = scmp.eq.s32.totalorder %s11, 0
    %p66 = por %p64, %p65
    %p67 = scmp.ne.s32.totalorder %s59, %s61
    %p68 = scmp.eq.s32.totalorder %s16, 1
    %p69 = por %p67, %p68
    %p70 = scmp.ne.s32.totalorder %s61, %s62
    %p71 = scmp.eq.s32.totalorder %s16, 0
    %p72 = por %p70, %p71
    %p73 = scmp.ne.s32.totalorder %s61, %s62
    %p74 = scmp.eq.s32.totalorder %s17, 1
    %p75 = por %p73, %p74
    %p77 = scmp.ne.s32.totalorder %s62, %s76
    %p78 = scmp.eq.s32.totalorder %s17, 0
    %p79 = por %p77, %p78
    %s81 = sadd.s32 %s80, 1
    %p84 = scmp.eq.s32.totalorder %s11, 1
    %p85 = scmp.ne.s32.totalorder %s80, %s82
    %p86 = scmp.eq.s32.totalorder %s11, 0
    %p87 = por %p85, %p86
    %p88 = scmp.ne.s32.totalorder %s80, %s82
    %p89 = scmp.eq.s32.totalorder %s16, 1
    %p90 = por %p88, %p89
    %p91 = scmp.ne.s32.totalorder %s82, %s83
    %p92 = scmp.eq.s32.totalorder %s16, 0
    %p93 = por %p91, %p92
    %p94 = scmp.ne.s32.totalorder %s82, %s83
    %p95 = scmp.eq.s32.totalorder %s17, 1
    %p96 = por %p94, %p95
    %p98 = scmp.ne.s32.totalorder %s83, %s97
    %p99 = scmp.eq.s32.totalorder %s17, 0
    %p100 = por %p98, %p99
    %s102 = sadd.s32 %s101, 1
    %p105 = scmp.eq.s32.totalorder %s11, 1
    %p106 = scmp.ne.s32.totalorder %s101, %s103
    %p107 = scmp.eq.s32.totalorder %s11, 0
    %p108 = por %p106, %p107
    %p109 = scmp.ne.s32.totalorder %s101, %s103
    %p110 = scmp.eq.s32.totalorder %s16, 1
    %p111 = por %p109, %p110
    %p112 = scmp.ne.s32.totalorder %s103, %s104
    %p113 = scmp.eq.s32.totalorder %s16, 0
    %p114 = por %p112, %p113
    %p115 = scmp.ne.s32.totalorder %s103, %s104
    %p116 = scmp.eq.s32.totalorder %s17, 1
    %p117 = por %p115, %p116
    %p119 = scmp.ne.s32.totalorder %s104, %s118
    %p120 = scmp.eq.s32.totalorder %s17, 0
    %p121 = por %p119, %p120
    %s123 = sadd.s32 %s122, 1
    %p126 = scmp.eq.s32.totalorder %s11, 1
    %p127 = scmp.ne.s32.totalorder %s122, %s124
    %p128 = scmp.eq.s32.totalorder %s11, 0
    %p129 = por %p127, %p128
    %p130 = scmp.ne.s32.totalorder %s122, %s124
    %p131 = scmp.eq.s32.totalorder %s16, 1
    %p132 = por %p130, %p131
    %p133 = scmp.ne.s32.totalorder %s124, %s125
    %p134 = scmp.eq.s32.totalorder %s16, 0
    %p135 = por %p133, %p134
    %p136 = scmp.ne.s32.totalorder %s124, %s125
    %p137 = scmp.eq.s32.totalorder %s17, 1
    %p138 = por %p136, %p137
    %p140 = scmp.ne.s32.totalorder %s125, %s139
    %p141 = scmp.eq.s32.totalorder %s17, 0
    %p142 = por %p140, %p141
    %s143 = ssub.s32 %s18, %s30
    %s144 = ssub.s32 %s19, %s26
    %s145 = sor.u32 %s143, %s144
    %p146 = scmp.eq.s32.totalorder %s145, 0
    %s148 = sadd.s32 %s147, 1
    %s149 = scalar_select %p146, %s147, %s148
    %p152 = pneg %p146
    %p153 = scmp.eq.s32.totalorder %s11, 1
    %p154 = por %p152, %p153
    %p155 = scmp.ne.s32.totalorder %s147, %s150
    %p156 = scmp.eq.s32.totalorder %s11, 0
    %p157 = por %p155, %p156
    %p158 = scmp.ne.s32.totalorder %s147, %s150
    %p159 = scmp.eq.s32.totalorder %s16, 1
    %p160 = por %p158, %p159
    %p161 = scmp.ne.s32.totalorder %s150, %s151
    %p162 = scmp.eq.s32.totalorder %s16, 0
    %p163 = por %p161, %p162
    %p164 = scmp.ne.s32.totalorder %s150, %s151
    %p165 = scmp.eq.s32.totalorder %s17, 1
    %p166 = por %p164, %p165
    %p168 = scmp.ne.s32.totalorder %s151, %s167
    %p169 = scmp.eq.s32.totalorder %s17, 0
    %p170 = por %p168, %p169
    %p171 = scmp.le.s32.totalorder 1, %s11
    %p172 = scmp.lt.s32.totalorder %s11, 3
    %p173 = pnand %p171, %p172
    %p174 = pneg %p173
    // Predicated region
    $region9: #{mlp_forward.1} parent=5 // pred_check
      _
    $region10: #{mlp_forward.1} parent=5 // pred_check_branch
      %176 = sbr.rel (%p173) target = $region12
    $region11: #{mlp_forward.1} parent=5 // pred_region
      %s177 = ssub.s32 %s11, 1
      // Predicated region
      $region13: #{mlp_forward.1} parent=11 // pred_check
        %p178 = pneg %p72
      $region14: #{mlp_forward.1} parent=11 // pred_check_branch
        %180 = sbr.rel (%p178) target = $region16
      $region15: #{mlp_forward.1} parent=11 // pred_region
        _
      $region16: #{mlp_forward.1} parent=11 // pred_fallthru
        _
      // Predicated region
      $region17: #{mlp_forward.1} parent=11 // pred_check
        %p181 = pneg %p93
      $region18: #{mlp_forward.1} parent=11 // pred_check_branch
        %183 = sbr.rel (%p181) target = $region20
      $region19: #{mlp_forward.1} parent=11 // pred_region
        _
      $region20: #{mlp_forward.1} parent=11 // pred_fallthru
        _
      // Predicated region
      $region21: #{mlp_forward.1} parent=11 // pred_check
        %p184 = pneg %p114
      $region22: #{mlp_forward.1} parent=11 // pred_check_branch
        %186 = sbr.rel (%p184) target = $region24
      $region23: #{mlp_forward.1} parent=11 // pred_region
        _
      $region24: #{mlp_forward.1} parent=11 // pred_fallthru
        _
      // Predicated region
      $region25: #{mlp_forward.1} parent=11 // pred_check
        %p187 = pneg %p135
      $region26: #{mlp_forward.1} parent=11 // pred_check_branch
        %189 = sbr.rel (%p187) target = $region28
      $region27: #{mlp_forward.1} parent=11 // pred_region
        _
      $region28: #{mlp_forward.1} parent=11 // pred_fallthru
        _
    $region12: #{mlp_forward.1} parent=5 // pred_fallthru
      _
    %p190 = scmp.lt.s32.totalorder %s11, 2
    // Predicated region
    $region29: #{mlp_forward.1} parent=5 // pred_check
      %p191 = pneg %p190
    $region30: #{mlp_forward.1} parent=5 // pred_check_branch
      %193 = sbr.rel (%p191) target = $region32
    $region31: #{mlp_forward.1} parent=5 // pred_region
      // Predicated region
      $region33: #{mlp_forward.1} parent=31 // pred_check
        %p194 = pneg %p45
      $region34: #{mlp_forward.1} parent=31 // pred_check_branch
        %196 = sbr.rel (%p194) target = $region36
      $region35: #{mlp_forward.1} parent=31 // pred_region
        %s197 = smul.u32 2, %s19
        %p198 = scmp.lt.s32.totalorder %s18, 1
        %s199 = scalar_select %p198, %s18, 1
        %p200 = scmp.lt.s32.totalorder %s197, 1
        %s201 = scalar_select %p200, %s197, 1
        %s202 = smul.addr %s199, 6
        %s203 = sadd.s32 %s201, %s202
        %s204 = smul.addr %s203, 8
        %s205 = scalar_lea.vmem %s0, %s204
        %s206 = smul.u32 2, %s19
      $region36: #{mlp_forward.1} parent=31 // pred_fallthru
        _
    $region32: #{mlp_forward.1} parent=5 // pred_fallthru
      _
    %p207 = scmp.le.s32.totalorder 1, %s11
    %p208 = scmp.lt.s32.totalorder %s11, 3
    %p209 = pnand %p207, %p208
    %p210 = pneg %p209
    // Predicated region
    $region37: #{mlp_forward.1} parent=5 // pred_check
      _
    $region38: #{mlp_forward.1} parent=5 // pred_check_branch
      %212 = sbr.rel (%p209) target = $region40
    $region39: #{mlp_forward.1} parent=5 // pred_region
      %s213 = ssub.s32 %s11, 1
      %s214 = smul.u32 2, %s21
      %p215 = scmp.lt.s32.totalorder %s20, 1
      %s216 = scalar_select %p215, %s20, 1
      %p217 = scmp.lt.s32.totalorder %s214, 1
      %s218 = scalar_select %p217, %s214, 1
      %s219 = smul.addr %s216, 6
      %s220 = sadd.s32 %s218, %s219
      %s221 = smul.addr %s220, 8
      %s222 = scalar_lea.vmem %s0, %s221
      %p223 = pneg %p51
      %p224 = pneg %p48
      %p225 = pneg %p72
      %p226 = pneg %p69
      %p227 = pneg %p93
      %p228 = pneg %p90
      %p229 = pneg %p114
      %p230 = pneg %p111
      %p231 = pneg %p135
      %p232 = pneg %p132
      %p233 = pneg %p163
      %p234 = pneg %p160
      %s235 = smul.u32 2, %s21
      %p236 = scmp.lt.s32.totalorder %s20, 1
      %s237 = scalar_select %p236, %s20, 1
      %p238 = scmp.lt.s32.totalorder %s235, 1
      %s239 = scalar_select %p238, %s235, 1
      %s240 = smul.addr %s237, 6
      %s241 = sadd.s32 %s239, %s240
      %s242 = smul.addr %s241, 8
      %s243 = scalar_lea.vmem %s5, %s242
      %s244 = smul.u32 2, %s21
      %p245 = scmp.lt.s32.totalorder %s20, 1
      %s246 = scalar_select %p245, %s20, 1
      %p247 = scmp.lt.s32.totalorder %s244, 1
      %s248 = scalar_select %p247, %s244, 1
      %s249 = smul.addr %s246, 6
      %s250 = sadd.s32 %s248, %s249
      %s251 = smul.addr %s250, 8
      %s252 = scalar_lea.vmem %s0, %s251
      %s253 = smul.u32 2, %s21
      %s254 = smul.u32 2, %s21
      %p255 = scmp.lt.s32.totalorder %s20, 1
      %s256 = scalar_select %p255, %s20, 1
      %p257 = scmp.lt.s32.totalorder %s254, 1
      %s258 = scalar_select %p257, %s254, 1
      %s259 = smul.addr %s256, 6
      %s260 = sadd.s32 %s258, %s259
      %s261 = smul.addr %s260, 8
      %s262 = scalar_lea.vmem %s5, %s261
      %s263 = smul.u32 2, %s21
      %v264 = vld [vmem:[%s252] sm:$0xff]
      %v265 = vld [vmem:[%s252 + $0x8] sm:$0xff]
      %v266 = vld [vmem:[%s252 + $0x10] sm:$0xff]
      %v267 = vld [vmem:[%s252 + $0x18] sm:$0xff]
      %v268 = vld [vmem:[%s252 + $0x20] sm:$0xff]
      %v269 = vld [vmem:[%s252 + $0x28] sm:$0xff]
      %v270 = vld [vmem:[%s1] sm:$0xff]
      %v271 = vld [vmem:[%s1 + $0x8] sm:$0xff]
      %v272 = vld [vmem:[%s1 + $0x10] sm:$0xff]
      %v273 = vld [vmem:[%s1 + $0x18] sm:$0xff]
      %v274 = vld [vmem:[%s1 + $0x20] sm:$0xff]
      %v275 = vld [vmem:[%s1 + $0x28] sm:$0xff]
      %v276 = vld [vmem:[%s1 + $0x30] sm:$0xff]
      %v277 = vld [vmem:[%s1 + $0x38] sm:$0xff]
      %v278 = vld [vmem:[%s1 + $0x40] sm:$0xff]
      %v279 = vld [vmem:[%s1 + $0x48] sm:$0xff]
      %v280 = vld [vmem:[%s1 + $0x50] sm:$0xff]
      %v281 = vld [vmem:[%s1 + $0x58] sm:$0xff]
      %v282 = vld [vmem:[%s2] sm:$0xff]
      %v283 = vld [vmem:[%s2 + $0x8] sm:$0xff]
      %v284 = vld [vmem:[%s2 + $0x10] sm:$0xff]
      %v285 = vld [vmem:[%s2 + $0x18] sm:$0xff]
      %v286 = vld [vmem:[%s2 + $0x20] sm:$0xff]
      %v287 = vld [vmem:[%s2 + $0x28] sm:$0xff]
      %v288 = vld [vmem:[%s2 + $0x30] sm:$0xff]
      %v289 = vld [vmem:[%s2 + $0x38] sm:$0xff]
      %v290 = vld [vmem:[%s2 + $0x40] sm:$0xff]
      %v291 = vld [vmem:[%s2 + $0x48] sm:$0xff]
      %v292 = vld [vmem:[%s2 + $0x50] sm:$0xff]
      %v293 = vld [vmem:[%s2 + $0x58] sm:$0xff]
      %295 = vset.pattern.permute.xlu0 0
      %296 = vperm.xlu0 %295, %v282
      %v297 = vpop.permute.xlu0 %296
      %300 = vset.pattern.permute.xlu0 0
      %301 = vperm.xlu0 %300, %v283
      %v302 = vpop.permute.xlu0 %301
      %305 = vset.pattern.permute.xlu0 0
      %306 = vperm.xlu0 %305, %v284
      %v307 = vpop.permute.xlu0 %306
      %310 = vset.pattern.permute.xlu0 0
      %311 = vperm.xlu0 %310, %v285
      %v312 = vpop.permute.xlu0 %311
      %315 = vset.pattern.permute.xlu0 0
      %316 = vperm.xlu0 %315, %v286
      %v317 = vpop.permute.xlu0 %316
      %320 = vset.pattern.permute.xlu0 0
      %321 = vperm.xlu0 %320, %v287
      %v322 = vpop.permute.xlu0 %321
      %325 = vset.pattern.permute.xlu0 0
      %326 = vperm.xlu0 %325, %v288
      %v327 = vpop.permute.xlu0 %326
      %330 = vset.pattern.permute.xlu0 0
      %331 = vperm.xlu0 %330, %v289
      %v332 = vpop.permute.xlu0 %331
      %335 = vset.pattern.permute.xlu0 0
      %336 = vperm.xlu0 %335, %v290
      %v337 = vpop.permute.xlu0 %336
      %340 = vset.pattern.permute.xlu0 0
      %341 = vperm.xlu0 %340, %v291
      %v342 = vpop.permute.xlu0 %341
      %345 = vset.pattern.permute.xlu0 0
      %346 = vperm.xlu0 %345, %v292
      %v347 = vpop.permute.xlu0 %346
      %350 = vset.pattern.permute.xlu0 0
      %351 = vperm.xlu0 %350, %v293
      %v352 = vpop.permute.xlu0 %351
      %vm354 = vcmask 195584
      %v356 = vsel %vm354, %v270, 0
      %v359 = vsel %vm354, %v271, 0
      %v362 = vsel %vm354, %v272, 0
      %v365 = vsel %vm354, %v273, 0
      %v368 = vsel %vm354, %v274, 0
      %v371 = vsel %vm354, %v275, 0
      %v374 = vsel %vm354, %v276, 0
      %v377 = vsel %vm354, %v277, 0
      %v380 = vsel %vm354, %v278, 0
      %v383 = vsel %vm354, %v279, 0
      %v386 = vsel %vm354, %v280, 0
      %v389 = vsel %vm354, %v281, 0
      %391 = vmatpush.msra.mxu0 0.0
      %392 = vmatpush.msra.mxu0 0.0
      %393 = vmatpush.msra.mxu0 0.0
      %394 = vmatpush.msra.mxu0 0.0
      %395 = vmatpush.msra.mxu0 0.0
      %396 = vmatpush.msra.mxu0 0.0
      %397 = vmatpush.msra.mxu0 0.0
      %398 = vmatpush.msra.mxu0 0.0
      %399 = vmatpush.msra.mxu0 0.0
      %400 = vmatpush.msra.mxu0 0.0
      %401 = vmatpush.msra.mxu0 0.0
      %402 = vmatpush.msra.mxu0 0.0
      %403 = vmatpush.msra.mxu0 0.0
      %404 = vmatpush.msra.mxu0 %v268
      %405 = vmatpush.msra.mxu0 %v266
      %406 = vmatpush.msra.mxu0 %v264
      %407 = vmatmul.f32.gmra.mxu0 %v356
      %v408 = vpop.f32.mrf.mxu0
      %v409 = vadd.f32 %v297, %v408
      %410 = vmatmul.f32.gmra.mxu0 %v359
      %v411 = vpop.f32.mrf.mxu0
      %v412 = vadd.f32 %v302, %v411
      %413 = vmatmul.f32.gmra.mxu0 %v362
      %v414 = vpop.f32.mrf.mxu0
      %v415 = vadd.f32 %v307, %v414
      %416 = vmatmul.f32.gmra.mxu0 %v365
      %v417 = vpop.f32.mrf.mxu0
      %v418 = vadd.f32 %v312, %v417
      %419 = vmatmul.f32.gmra.mxu0 %v368
      %v420 = vpop.f32.mrf.mxu0
      %v421 = vadd.f32 %v317, %v420
      %422 = vmatmul.f32.gmra.mxu0 %v371
      %v423 = vpop.f32.mrf.mxu0
      %v424 = vadd.f32 %v322, %v423
      %425 = vmatmul.f32.gmra.mxu0 %v374
      %v426 = vpop.f32.mrf.mxu0
      %v427 = vadd.f32 %v327, %v426
      %428 = vmatmul.f32.gmra.mxu0 %v377
      %v429 = vpop.f32.mrf.mxu0
      %v430 = vadd.f32 %v332, %v429
      %431 = vmatmul.f32.gmra.mxu0 %v380
      %v432 = vpop.f32.mrf.mxu0
      %v433 = vadd.f32 %v337, %v432
      %434 = vmatmul.f32.gmra.mxu0 %v383
      %v435 = vpop.f32.mrf.mxu0
      %v436 = vadd.f32 %v342, %v435
      %437 = vmatmul.f32.gmra.mxu0 %v386
      %v438 = vpop.f32.mrf.mxu0
      %v439 = vadd.f32 %v347, %v438
      %440 = vmatmul.f32.gmra.mxu0 %v389
      %v441 = vpop.f32.mrf.mxu0
      %v442 = vadd.f32 %v352, %v441
      %443 = vdwg.mxu0
      %444 = vmatpush.msra.mxu0 0.0
      %445 = vmatpush.msra.mxu0 0.0
      %446 = vmatpush.msra.mxu0 0.0
      %447 = vmatpush.msra.mxu0 0.0
      %448 = vmatpush.msra.mxu0 0.0
      %449 = vmatpush.msra.mxu0 0.0
      %450 = vmatpush.msra.mxu0 0.0
      %451 = vmatpush.msra.mxu0 0.0
      %452 = vmatpush.msra.mxu0 0.0
      %453 = vmatpush.msra.mxu0 0.0
      %454 = vmatpush.msra.mxu0 0.0
      %455 = vmatpush.msra.mxu0 0.0
      %456 = vmatpush.msra.mxu0 0.0
      %457 = vmatpush.msra.mxu0 %v269
      %458 = vmatpush.msra.mxu0 %v267
      %459 = vmatpush.msra.mxu0 %v265
      %460 = vmatmul.f32.gmra.mxu0 %v356
      %v461 = vpop.f32.mrf.mxu0
      %v462 = vadd.f32 %v297, %v461
      %463 = vmatmul.f32.gmra.mxu0 %v359
      %v464 = vpop.f32.mrf.mxu0
      %v465 = vadd.f32 %v302, %v464
      %466 = vmatmul.f32.gmra.mxu0 %v362
      %v467 = vpop.f32.mrf.mxu0
      %v468 = vadd.f32 %v307, %v467
      %469 = vmatmul.f32.gmra.mxu0 %v365
      %v470 = vpop.f32.mrf.mxu0
      %v471 = vadd.f32 %v312, %v470
      %472 = vmatmul.f32.gmra.mxu0 %v368
      %v473 = vpop.f32.mrf.mxu0
      %v474 = vadd.f32 %v317, %v473
      %475 = vmatmul.f32.gmra.mxu0 %v371
      %v476 = vpop.f32.mrf.mxu0
      %v477 = vadd.f32 %v322, %v476
      %478 = vmatmul.f32.gmra.mxu0 %v374
      %v479 = vpop.f32.mrf.mxu0
      %v480 = vadd.f32 %v327, %v479
      %481 = vmatmul.f32.gmra.mxu0 %v377
      %v482 = vpop.f32.mrf.mxu0
      %v483 = vadd.f32 %v332, %v482
      %484 = vmatmul.f32.gmra.mxu0 %v380
      %v485 = vpop.f32.mrf.mxu0
      %v486 = vadd.f32 %v337, %v485
      %487 = vmatmul.f32.gmra.mxu0 %v383
      %v488 = vpop.f32.mrf.mxu0
      %v489 = vadd.f32 %v342, %v488
      %490 = vmatmul.f32.gmra.mxu0 %v386
      %v491 = vpop.f32.mrf.mxu0
      %v492 = vadd.f32 %v347, %v491
      %493 = vmatmul.f32.gmra.mxu0 %v389
      %v494 = vpop.f32.mrf.mxu0
      %v495 = vadd.f32 %v352, %v494
      %496 = vdwg.mxu0
      %v497 = vmax.f32 %v409, 0.0
      %v498 = vmax.f32 %v462, 0.0
      %v499 = vmax.f32 %v412, 0.0
      %v500 = vmax.f32 %v465, 0.0
      %v501 = vmax.f32 %v415, 0.0
      %v502 = vmax.f32 %v468, 0.0
      %v503 = vmax.f32 %v418, 0.0
      %v504 = vmax.f32 %v471, 0.0
      %v505 = vmax.f32 %v421, 0.0
      %v506 = vmax.f32 %v474, 0.0
      %v507 = vmax.f32 %v424, 0.0
      %v508 = vmax.f32 %v477, 0.0
      %v509 = vmax.f32 %v427, 0.0
      %v510 = vmax.f32 %v480, 0.0
      %v511 = vmax.f32 %v430, 0.0
      %v512 = vmax.f32 %v483, 0.0
      %v513 = vmax.f32 %v433, 0.0
      %v514 = vmax.f32 %v486, 0.0
      %v515 = vmax.f32 %v436, 0.0
      %v516 = vmax.f32 %v489, 0.0
      %v517 = vmax.f32 %v439, 0.0
      %v518 = vmax.f32 %v492, 0.0
      %v519 = vmax.f32 %v442, 0.0
      %v520 = vmax.f32 %v495, 0.0
      %v521 = vld [vmem:[%s3] sm:$0xff]
      %v522 = vld [vmem:[%s3 + $0x8] sm:$0xff]
      %v523 = vld [vmem:[%s3 + $0x10] sm:$0xff]
      %v524 = vld [vmem:[%s4] sm:$0xff]
      %v525 = vld [vmem:[%s4 + $0x8] sm:$0xff]
      %v526 = vld [vmem:[%s4 + $0x10] sm:$0xff]
      %528 = vset.pattern.permute.xlu0 0
      %529 = vperm.xlu0 %528, %v524
      %v530 = vpop.permute.xlu0 %529
      %533 = vset.pattern.permute.xlu0 0
      %534 = vperm.xlu0 %533, %v525
      %v535 = vpop.permute.xlu0 %534
      %538 = vset.pattern.permute.xlu0 0
      %539 = vperm.xlu0 %538, %v526
      %v540 = vpop.permute.xlu0 %539
      %vm542 = vcmask 785408
      %v544 = vsel %vm542, %v521, 0
      %v547 = vsel %vm542, %v522, 0
      %v550 = vsel %vm542, %v523, 0
      %552 = vmatpush.msra.mxu0 0.0
      %553 = vmatpush.msra.mxu0 0.0
      %554 = vmatpush.msra.mxu0 0.0
      %555 = vmatpush.msra.mxu0 0.0
      %556 = vmatpush.msra.mxu0 %v519
      %557 = vmatpush.msra.mxu0 %v517
      %558 = vmatpush.msra.mxu0 %v515
      %559 = vmatpush.msra.mxu0 %v513
      %560 = vmatpush.msra.mxu0 %v511
      %561 = vmatpush.msra.mxu0 %v509
      %562 = vmatpush.msra.mxu0 %v507
      %563 = vmatpush.msra.mxu0 %v505
      %564 = vmatpush.msra.mxu0 %v503
      %565 = vmatpush.msra.mxu0 %v501
      %566 = vmatpush.msra.mxu0 %v499
      %567 = vmatpush.msra.mxu0 %v497
      %568 = vmatmul.f32.gmra.mxu0 %v544
      %v569 = vpop.f32.mrf.mxu0
      %v570 = vadd.f32 %v530, %v569
      %571 = vmatmul.f32.gmra.mxu0 %v547
      %v572 = vpop.f32.mrf.mxu0
      %v573 = vadd.f32 %v535, %v572
      %574 = vmatmul.f32.gmra.mxu0 %v550
      %v575 = vpop.f32.mrf.mxu0
      %v576 = vadd.f32 %v540, %v575
      %577 = vdwg.mxu0
      %578 = vmatpush.msra.mxu0 0.0
      %579 = vmatpush.msra.mxu0 0.0
      %580 = vmatpush.msra.mxu0 0.0
      %581 = vmatpush.msra.mxu0 0.0
      %582 = vmatpush.msra.mxu0 %v520
      %583 = vmatpush.msra.mxu0 %v518
      %584 = vmatpush.msra.mxu0 %v516
      %585 = vmatpush.msra.mxu0 %v514
      %586 = vmatpush.msra.mxu0 %v512
      %587 = vmatpush.msra.mxu0 %v510
      %588 = vmatpush.msra.mxu0 %v508
      %589 = vmatpush.msra.mxu0 %v506
      %590 = vmatpush.msra.mxu0 %v504
      %591 = vmatpush.msra.mxu0 %v502
      %592 = vmatpush.msra.mxu0 %v500
      %593 = vmatpush.msra.mxu0 %v498
      %594 = vmatmul.f32.gmra.mxu0 %v544
      %v595 = vpop.f32.mrf.mxu0
      %v596 = vadd.f32 %v530, %v595
      %597 = vmatmul.f32.gmra.mxu0 %v547
      %v598 = vpop.f32.mrf.mxu0
      %v599 = vadd.f32 %v535, %v598
      %600 = vmatmul.f32.gmra.mxu0 %v550
      %v601 = vpop.f32.mrf.mxu0
      %v602 = vadd.f32 %v540, %v601
      %603 = vdwg.mxu0
      %604 = vst [vmem:[%s262] sm:$0xff] %v570
      %605 = vst [vmem:[%s262 + $0x8] sm:$0xff] %v596
      %606 = vst [vmem:[%s262 + $0x10] sm:$0xff] %v573
      %607 = vst [vmem:[%s262 + $0x18] sm:$0xff] %v599
      %608 = vst [vmem:[%s262 + $0x20] sm:$0xff] %v576
      %609 = vst [vmem:[%s262 + $0x28] sm:$0xff] %v602
      %s610 = smul.u32 2, %s21
      %p611 = scmp.lt.s32.totalorder %s20, 1
      %s612 = scalar_select %p611, %s20, 1
      %p613 = scmp.lt.s32.totalorder %s610, 1
      %s614 = scalar_select %p613, %s610, 1
      %s615 = smul.addr %s612, 6
      %s616 = sadd.s32 %s614, %s615
      %s617 = smul.addr %s616, 8
      %s618 = scalar_lea.vmem %s5, %s617
      // Predicated region
      $region41: #{mlp_forward.1} parent=39 // pred_check
        %p619 = pneg %p160
      $region42: #{mlp_forward.1} parent=39 // pred_check_branch
        %621 = sbr.rel (%p619) target = $region44
      $region43: #{mlp_forward.1} parent=39 // pred_region
        %s622 = smul.u32 2, %s21
      $region44: #{mlp_forward.1} parent=39 // pred_fallthru
        _
    $region40: #{mlp_forward.1} parent=5 // pred_fallthru
      _
    %p623 = scmp.le.s32.totalorder 2, %s11
    // Predicated region
    $region45: #{mlp_forward.1} parent=5 // pred_check
      %p624 = pneg %p623
    $region46: #{mlp_forward.1} parent=5 // pred_check_branch
      %626 = sbr.rel (%p624) target = $region48
    $region47: #{mlp_forward.1} parent=5 // pred_region
      %s627 = ssub.s32 %s11, 2
      // Predicated region
      $region49: #{mlp_forward.1} parent=47 // pred_check
        %p628 = pneg %p166
      $region50: #{mlp_forward.1} parent=47 // pred_check_branch
        %630 = sbr.rel (%p628) target = $region52
      $region51: #{mlp_forward.1} parent=47 // pred_region
        %s631 = smul.u32 2, %s23
        %p632 = scmp.lt.s32.totalorder %s22, 1
        %s633 = scalar_select %p632, %s22, 1
        %p634 = scmp.lt.s32.totalorder %s631, 1
        %s635 = scalar_select %p634, %s631, 1
        %s636 = smul.addr %s633, 6
        %s637 = sadd.s32 %s635, %s636
        %s638 = smul.addr %s637, 8
        %s639 = scalar_lea.vmem %s5, %s638
      $region52: #{mlp_forward.1} parent=47 // pred_fallthru
        _
    $region48: #{mlp_forward.1} parent=5 // pred_fallthru
      _
  $region6: #{mlp_forward.1} parent=0 // loop_footer
    %s15 = sadd.s32 1, %s11
  $region7: #{mlp_forward.1} parent=0 // loop_footer_branch
    %10 = sbr.rel target = $region3
  $region8: #{mlp_forward.1} parent=0 // loop_exit
    _

</llo_original>
